<compile_context>
chip_gen: v7x
topology: tpu7x:2x2x1
jax: 0.10.0
libtpu: 0.0.40
codegen_flags: <defaults>
</compile_context>

<pallas_src>
import functools
import math

import jax
import jax.numpy as jnp
from jax import lax
from jax.experimental import pallas as pl
from jax.experimental.pallas import tpu as pltpu

_INV_SQRT2 = 1.0 / math.sqrt(2.0)
_LANE_ALIGN = 256              # v6e/v7x MXU is 2x256x256; avoid partial passes
_HEADROOM = 2 * 1024 * 1024    # compiler-internal scratch headroom


def _round_up(x, m):
    return ((x + m - 1) // m) * m


def _gelu(h, approximate):
    if approximate:
        return jax.nn.gelu(h, approximate=True)            # tanh -> EUP slot
    return 0.5 * h * (1.0 + lax.erf(h * _INV_SQRT2))        # torch.nn.GELU default


def _vmem_budget_bytes():
    try:
        cap = int(pltpu.get_tpu_info().vmem_capacity_bytes)
    except Exception:
        cap = 64 * 1024 * 1024                              # conservative (v7x per-TC)
    return max(32 * 1024 * 1024, (cap * 3) // 4)


def _mlp_kernel_resident(x_ref, w1_ref, b1_ref, w2_ref, b2_ref, o_ref, *, approximate):
    # Weights fully VMEM-resident (constant index_map -> DMA'd once); only the
    # token axis iterates. dropout(p=0.0) is the identity.
    h = jnp.dot(x_ref[...], w1_ref[...], preferred_element_type=jnp.float32)
    h = _gelu(h + b1_ref[...], approximate)
    o_ref[...] = (jnp.dot(h.astype(w2_ref.dtype), w2_ref[...],
                          preferred_element_type=jnp.float32)
                  + b2_ref[...]).astype(o_ref.dtype)


def _mlp_kernel_tiled(x_ref, w1_ref, b1_ref, w2_ref, b2_ref, o_ref, acc_ref, *, approximate):
    # grid = (token tile i [parallel], hidden tile k [arbitrary / reduction]).
    k = pl.program_id(1)

    @pl.when(k == 0)
    def _():
        # Seed the accumulator with b2 -> no extra epilogue add.
        acc_ref[...] = jnp.broadcast_to(b2_ref[...], acc_ref.shape)

    h = jnp.dot(x_ref[...], w1_ref[...], preferred_element_type=jnp.float32)
    h = _gelu(h + b1_ref[...], approximate)
    acc_ref[...] += jnp.dot(h.astype(w2_ref.dtype), w2_ref[...],
                            preferred_element_type=jnp.float32)

    @pl.when(k == pl.num_programs(1) - 1)
    def _():
        o_ref[...] = acc_ref[...].astype(o_ref.dtype)


def make_mlp(w1, b1, w2, b2, *, compute_dtype=jnp.bfloat16, tm=512, th=1024,
             approximate_gelu=False):
    """Build MLP forward: fc1 -> GELU -> dropout(p=0) -> fc2 -> dropout(p=0).

    Weights are stored pre-transposed as (in, out), matching the x @ W layout.
    Padding/casting of the weights happens ONCE here (hoisted out of the
    per-call path). Matmul inputs run in `compute_dtype` (default bf16) with
    f32 MXU accumulation; bias adds and GELU stay f32; output dtype follows x.
    NOTE: bf16 inputs imply a small precision loss vs an f32 torch reference.
    """
    Cin, H = w1.shape
    H2, Cout = w2.shape
    assert H2 == H and b1.shape == (H,) and b2.shape == (Cout,)

    cdt = jnp.dtype(compute_dtype)
    c = cdt.itemsize
    row = 16 if c == 2 else 8              # sublane granularity
    f32 = jnp.float32

    Cin_p = _round_up(Cin, _LANE_ALIGN)
    Cout_p = _round_up(Cout, _LANE_ALIGN)
    H_align = _round_up(H, _LANE_ALIGN)

    budget = _vmem_budget_bytes()

    def resident_est(tm_, H_):
        return (2 * tm_ * Cin_p * c          # x tile (double buffered)
                + 2 * Cin_p * H_ * c         # W1 (buffer accounting, conservative)
                + 2 * H_ * 4                 # b1 (f32)
                + 2 * H_ * Cout_p * c        # W2
                + 2 * Cout_p * 4             # b2 (f32)
                + 2 * tm_ * Cout_p * 4       # out tile (worst case f32)
                + tm_ * H_ * (4 + c)         # fc1 intermediate + cast copy
                + _HEADROOM)

    def tiled_est(tm_, th_):
        return (2 * tm_ * Cin_p * c
                + 2 * Cin_p * th_ * c
                + 2 * th_ * 4
                + 2 * th_ * Cout_p * c
                + 2 * Cout_p * 4
                + 2 * tm_ * Cout_p * 4
                + tm_ * Cout_p * 4           # f32 accumulator scratch
                + tm_ * th_ * (4 + c)        # fc1 intermediate + cast copy
                + _HEADROOM)

    tm_cands = sorted({max(row, _round_up(t, row)) for t in (tm, 512, 256, 128)},
                      reverse=True)

    resident = False
    tm_max = tm_cands[-1]
    for t in tm_cands:
        if resident_est(t, H_align) <= budget:
            resident, tm_max = True, t
            break

    if resident:
        H_p = H_align
        th_p = H_p
    else:
        th_p = max(_LANE_ALIGN, min(_round_up(th, _LANE_ALIGN), H_align))
        H_p = _round_up(H_align, th_p)
        tm_max = tm_cands[-1]
        for t in tm_cands:
            if tiled_est(t, th_p) <= budget:
                tm_max = t
                break

    # Zero-padding is semantics-preserving: padded b1/W1 columns give
    # h = GELU(0) = 0, and padded W2 rows/cols are zero.
    w1_p = jnp.pad(jnp.asarray(w1, cdt), ((0, Cin_p - Cin), (0, H_p - H)))
    b1_p = jnp.pad(jnp.asarray(b1, f32), ((0, H_p - H),)).reshape(1, H_p)
    w2_p = jnp.pad(jnp.asarray(w2, cdt), ((0, H_p - H), (0, Cout_p - Cout)))
    b2_p = jnp.pad(jnp.asarray(b2, f32), ((0, Cout_p - Cout),)).reshape(1, Cout_p)

    def apply(x):
        B, N, Cin_x = x.shape
        assert Cin_x == Cin
        M = B * N
        out_dtype = x.dtype

        # Token tile: big, sublane-aligned; prefer >=2 tiles when possible so
        # megacore (v7x: 2 TensorCores) can shard the 'parallel' axis.
        tm_ = max(row, min(tm_max, _round_up(M, row)))
        if M >= 2 * row and _round_up(M, tm_) // tm_ < 2:
            tm_ = max(row, _round_up((M + 1) // 2, row))
        M_p = _round_up(M, tm_)
        n_tok = M_p // tm_

        x2d = x.reshape(M, Cin)
        if x2d.dtype != cdt:
            x2d = x2d.astype(cdt)
        if M_p != M or Cin_p != Cin:
            x2d = jnp.pad(x2d, ((0, M_p - M), (0, Cin_p - Cin)))

        o_c = jnp.dtype(out_dtype).itemsize
        flops = 2 * M_p * (Cin_p * H_p + H_p * Cout_p)

        if resident:
            grid = (n_tok,)
            in_specs = [
                pl.BlockSpec((tm_, Cin_p), lambda i: (i, 0)),     # x row tile
                pl.BlockSpec((Cin_p, H_p), lambda i: (0, 0)),     # W1, resident
                pl.BlockSpec((1, H_p), lambda i: (0, 0)),         # b1, resident
                pl.BlockSpec((H_p, Cout_p), lambda i: (0, 0)),    # W2, resident
                pl.BlockSpec((1, Cout_p), lambda i: (0, 0)),      # b2, resident
            ]
            out_spec = pl.BlockSpec((tm_, Cout_p), lambda i: (i, 0))
            scratch = []
            kernel = functools.partial(_mlp_kernel_resident,
                                       approximate=approximate_gelu)
            dims = ("parallel",)
            w_bytes = (w1_p.size + w2_p.size) * c                 # read once
        else:
            grid = (n_tok, H_p // th_p)
            in_specs = [
                pl.BlockSpec((tm_, Cin_p), lambda i, k: (i, 0)),
                pl.BlockSpec((Cin_p, th_p), lambda i, k: (0, k)),
                pl.BlockSpec((1, th_p), lambda i, k: (0, k)),
                pl.BlockSpec((th_p, Cout_p), lambda i, k: (k, 0)),
                pl.BlockSpec((1, Cout_p), lambda i, k: (0, 0)),
            ]
            out_spec = pl.BlockSpec((tm_, Cout_p), lambda i, k: (i, 0))
            scratch = [pltpu.VMEM((tm_, Cout_p), jnp.float32)]
            kernel = functools.partial(_mlp_kernel_tiled,
                                       approximate=approximate_gelu)
            dims = ("parallel", "arbitrary")
            w_bytes = (w1_p.size + w2_p.size) * c * n_tok         # re-streamed

        cost = pl.CostEstimate(
            flops=int(flops),
            transcendentals=int(M_p * H_p),
            bytes_accessed=int(x2d.size * c + w_bytes
                               + (b1_p.size + b2_p.size) * 4
                               + M_p * Cout_p * o_c),
        )

        out2d = pl.pallas_call(
            kernel,
            out_shape=jax.ShapeDtypeStruct((M_p, Cout_p), out_dtype),
            grid_spec=pltpu.PrefetchScalarGridSpec(
                num_scalar_prefetch=0,
                grid=grid,
                in_specs=in_specs,
                out_specs=out_spec,
                scratch_shapes=scratch,
            ),
            compiler_params=pltpu.CompilerParams(
                dimension_semantics=dims,
                vmem_limit_bytes=int(budget),
            ),
            cost_estimate=cost,
        )(x2d, w1_p, b1_p, w2_p, b2_p)

        return out2d[:M, :Cout].reshape(B, N, Cout)

    return apply


def mlp_pallas(x, w1, b1, w2, b2, **kwargs):
    # One-shot convenience wrapper. For repeated calls, build once with
    # make_mlp(...) so weight pad+cast stays out of the per-call path.
    return make_mlp(w1, b1, w2, b2, **kwargs)(x)


def mlp_reference(x, w1, b1, w2, b2):
    h = jnp.einsum("bnc,ch->bnh", x, w1) + b1
    h = 0.5 * h * (1.0 + lax.erf(h / jnp.sqrt(2.0)))
    return jnp.einsum("bnh,ho->bno", h, w2) + b2


# TODO(synk): dropout with p > 0 (training mode) is not implemented; the module
# default p=0.0 makes it the identity, which is what this kernel computes.

if __name__ == "__main__":
    key = jax.random.PRNGKey(0)
    B, N, Cin, Hid, Cout = 2, 8, 32, 64, 32   # out_features defaults to in_features

    k_x, k_w1, k_b1, k_w2, k_b2 = jax.random.split(key, 5)
    x = jax.random.normal(k_x, (B, N, Cin), dtype=jnp.float32)

    # PyTorch nn.Linear-style init; weights kept pre-transposed as (in, out).
    bound1 = 1.0 / math.sqrt(Cin)
    w1 = jax.random.uniform(k_w1, (Cin, Hid), minval=-bound1, maxval=bound1,
                            dtype=jnp.float32)
    b1 = jax.random.uniform(k_b1, (Hid,), minval=-bound1, maxval=bound1,
                            dtype=jnp.float32)
    bound2 = 1.0 / math.sqrt(Hid)
    w2 = jax.random.uniform(k_w2, (Hid, Cout), minval=-bound2, maxval=bound2,
                            dtype=jnp.float32)
    b2 = jax.random.uniform(k_b2, (Cout,), minval=-bound2, maxval=bound2,
                            dtype=jnp.float32)

    ref = mlp_reference(x, w1, b1, w2, b2)

    # Default path: bf16 matmul inputs (MXU-rate), f32 accumulation/GELU.
    mlp_bf16 = make_mlp(w1, b1, w2, b2)
    out_bf16 = jax.block_until_ready(mlp_bf16(x))
    assert out_bf16.shape == (B, N, Cout)
    assert jnp.allclose(out_bf16, ref, atol=3e-2, rtol=3e-2), "bf16 mismatch vs reference"

    # Full-f32 path: tight match against the f32 (PyTorch-equivalent) reference.
    mlp_f32 = make_mlp(w1, b1, w2, b2, compute_dtype=jnp.float32)
    out_f32 = jax.block_until_ready(mlp_f32(x))
    assert out_f32.shape == (B, N, Cout)
    assert jnp.allclose(out_f32, ref, atol=1e-5, rtol=1e-5), "f32 mismatch vs reference"

    print("KERNEL_OK")
</pallas_src>

<mosaic_0001>
module attributes {stable_mosaic.version = 11 : i64} {
  func.func @_mlp_kernel_resident(%arg0: i32, %arg1: memref<16x256xbf16, #tpu.memory_space<vmem>>, %arg2: memref<256x256xbf16, #tpu.memory_space<vmem>>, %arg3: memref<1x256xf32, #tpu.memory_space<vmem>>, %arg4: memref<256x256xbf16, #tpu.memory_space<vmem>>, %arg5: memref<1x256xf32, #tpu.memory_space<vmem>>, %arg6: memref<16x256xf32, #tpu.memory_space<vmem>>) attributes {dimension_semantics = [#tpu.dimension_semantics<parallel>], iteration_bounds = array<i64: 1>, scalar_prefetch = 0 : i64, scratch_operands = 0 : i64, tpu.core_type = #tpu.core_type<tc>, window_params = [{transform_indices = @transform_0, window_bounds = array<i64: 16, 256>}, {pipeline_mode = #tpu.pipeline_mode<synchronous>, transform_indices = @transform_1, window_bounds = array<i64: 256, 256>}, {pipeline_mode = #tpu.pipeline_mode<synchronous>, transform_indices = @transform_2, window_bounds = array<i64: 1, 256>}, {pipeline_mode = #tpu.pipeline_mode<synchronous>, transform_indices = @transform_3, window_bounds = array<i64: 256, 256>}, {pipeline_mode = #tpu.pipeline_mode<synchronous>, transform_indices = @transform_4, window_bounds = array<i64: 1, 256>}, {transform_indices = @transform_5, window_bounds = array<i64: 16, 256>}]} {
    %c0 = arith.constant 0 : index
    %c0_0 = arith.constant 0 : index
    %0 = vector.load %arg1[%c0, %c0_0] : memref<16x256xbf16, #tpu.memory_space<vmem>>, vector<16x256xbf16>
    %c0_1 = arith.constant 0 : index
    %c0_2 = arith.constant 0 : index
    %1 = vector.load %arg2[%c0_1, %c0_2] : memref<256x256xbf16, #tpu.memory_space<vmem>>, vector<256x256xbf16>
    %cst = arith.constant dense<0.000000e+00> : vector<16x256xf32>
    %2 = tpu.matmul %0, %1, %cst {dimension_numbers = #tpu.dot_dimension_numbers<[1], [0], [0], [1], [0, 0, 1, 1], [], []>} : vector<16x256xbf16>, vector<256x256xbf16>, vector<16x256xf32> -> vector<16x256xf32>
    %c0_3 = arith.constant 0 : index
    %c0_4 = arith.constant 0 : index
    %3 = vector.load %arg3[%c0_3, %c0_4] : memref<1x256xf32, #tpu.memory_space<vmem>>, vector<1x256xf32>
    %4 = vector.broadcast %3 : vector<1x256xf32> to vector<16x256xf32>
    %5 = arith.addf %2, %4 : vector<16x256xf32>
    %cst_5 = arith.constant 5.000000e-01 : f32
    %6 = vector.broadcast %cst_5 : f32 to vector<16x256xf32>
    %7 = arith.mulf %6, %5 : vector<16x256xf32>
    %cst_6 = arith.constant 0.707106769 : f32
    %8 = vector.broadcast %cst_6 : f32 to vector<16x256xf32>
    %9 = arith.mulf %5, %8 : vector<16x256xf32>
    %10 = math.erf %9 : vector<16x256xf32>
    %cst_7 = arith.constant 1.000000e+00 : f32
    %11 = vector.broadcast %cst_7 : f32 to vector<16x256xf32>
    %12 = arith.addf %11, %10 : vector<16x256xf32>
    %13 = arith.mulf %7, %12 : vector<16x256xf32>
    %14 = arith.truncf %13 : vector<16x256xf32> to vector<16x256xbf16>
    %c0_8 = arith.constant 0 : index
    %c0_9 = arith.constant 0 : index
    %15 = vector.load %arg4[%c0_8, %c0_9] : memref<256x256xbf16, #tpu.memory_space<vmem>>, vector<256x256xbf16>
    %cst_10 = arith.constant dense<0.000000e+00> : vector<16x256xf32>
    %16 = tpu.matmul %14, %15, %cst_10 {dimension_numbers = #tpu.dot_dimension_numbers<[1], [0], [0], [1], [0, 0, 1, 1], [], []>} : vector<16x256xbf16>, vector<256x256xbf16>, vector<16x256xf32> -> vector<16x256xf32>
    %c0_11 = arith.constant 0 : index
    %c0_12 = arith.constant 0 : index
    %17 = vector.load %arg5[%c0_11, %c0_12] : memref<1x256xf32, #tpu.memory_space<vmem>>, vector<1x256xf32>
    %18 = vector.broadcast %17 : vector<1x256xf32> to vector<16x256xf32>
    %19 = arith.addf %16, %18 : vector<16x256xf32>
    %c0_13 = arith.constant 0 : index
    %c0_14 = arith.constant 0 : index
    %20 = vector.load %arg6[%c0_13, %c0_14] : memref<16x256xf32, #tpu.memory_space<vmem>>, vector<16x256xf32>
    tpu.vector_store %arg6[%c0_13, %c0_14], %19 {strides = array<i32>} : memref<16x256xf32, #tpu.memory_space<vmem>>, vector<16x256xf32>,
    return
  }
  func.func @transform_0(%arg0: i32) -> (i32, i32) {
    %c0_i32 = arith.constant 0 : i32
    %c0_i32_0 = arith.constant 0 : i32
    return %arg0, %c0_i32 : i32, i32
  }
  func.func @transform_1(%arg0: i32) -> (i32, i32) {
    %c0_i32 = arith.constant 0 : i32
    %c0_i32_0 = arith.constant 0 : i32
    %c0_i32_1 = arith.constant 0 : i32
    return %c0_i32, %c0_i32_0 : i32, i32
  }
  func.func @transform_2(%arg0: i32) -> (i32, i32) {
    %c0_i32 = arith.constant 0 : i32
    %c0_i32_0 = arith.constant 0 : i32
    %c0_i32_1 = arith.constant 0 : i32
    return %c0_i32, %c0_i32_0 : i32, i32
  }
  func.func @transform_3(%arg0: i32) -> (i32, i32) {
    %c0_i32 = arith.constant 0 : i32
    %c0_i32_0 = arith.constant 0 : i32
    %c0_i32_1 = arith.constant 0 : i32
    return %c0_i32, %c0_i32_0 : i32, i32
  }
  func.func @transform_4(%arg0: i32) -> (i32, i32) {
    %c0_i32 = arith.constant 0 : i32
    %c0_i32_0 = arith.constant 0 : i32
    %c0_i32_1 = arith.constant 0 : i32
    return %c0_i32, %c0_i32_0 : i32, i32
  }
  func.func @transform_5(%arg0: i32) -> (i32, i32) {
    %c0_i32 = arith.constant 0 : i32
    %c0_i32_0 = arith.constant 0 : i32
    return %arg0, %c0_i32 : i32, i32
  }
}

</mosaic_0001>

<llo_original>
// kernel: tpu_custom_call.1
$region0: #{tpu_custom_call.1}
  #allocation0 [shape = 'u32[]', space=smem, size = 0x4, offset = 0x4, fixed_abs, tag = 'smem constant byte address 0x4 - core index']
  #allocation1 [shape = 'u32[144,128]{1,0:T(1,128)}', space=vmem, size = 0x12000, scoped, tag = 'internal scratch']
  %s0 = inlined_call_operand.hbm [shape: bf16[16,256], index: 0, kind: input, shape index: {}]
  %s1 = inlined_call_operand.hbm [shape: bf16[256,256], index: 1, kind: input, shape index: {}]
  %s2 = inlined_call_operand.vmem [shape: f32[1,256], index: 2, kind: input, shape index: {}]
  %s3 = inlined_call_operand.hbm [shape: bf16[256,256], index: 3, kind: input, shape index: {}]
  %s4 = inlined_call_operand.vmem [shape: f32[1,256], index: 4, kind: input, shape index: {}]
  %s5 = inlined_call_operand.hbm [shape: f32[16,256], index: 5, kind: output, shape index: {}]
  %s6 = sld [smem:[#allocation0]]
  $region42: #{tpu_custom_call.1} parent=0
    _
  %s8 = ssub.s32 1, %s6
  %s9 = scalar_select 0, %s8, %s6
  $region1: #{tpu_custom_call.1} parent=0
    #allocation2 [shape = 'u8[8192]{0}', space=vmem, size = 0x2000, scoped, tag = 'input window, operand 0, single buffered']
    #allocation3 [shape = 's32[1]{0}', space=sflag, size = 0x4, scoped, tag = 'scoped memory for tpu_custom_call.1']
    #allocation4 [shape = 's32[1]{0}', space=sflag, size = 0x4, scoped, tag = 'scoped memory for tpu_custom_call.1']
    #allocation5 [shape = 'u8[131072]{0}', space=vmem, size = 0x20000, scoped, tag = 'input window, operand 1, single buffered']
    #allocation6 [shape = 's32[1]{0}', space=sflag, size = 0x4, scoped, tag = 'scoped memory for tpu_custom_call.1']
    #allocation7 [shape = 'u8[131072]{0}', space=vmem, size = 0x20000, scoped, tag = 'input window, operand 3, single buffered']
    #allocation8 [shape = 'u8[16384]{0}', space=vmem, size = 0x4000, scoped, tag = 'output window, operand 0, single buffered']
    %10 = vsyncpa [#allocation3], 0
    %11 = vsyncpa [#allocation6], 0
    %12 = vsyncpa [#allocation4], 0
    // Predicated region
    $region2: #{tpu_custom_call.1} parent=1 // pred_check
      _
    $region3: #{tpu_custom_call.1} parent=1 // pred_check_branch
      %14 = sbr.rel (0) target = $region5
    $region4: #{tpu_custom_call.1} parent=1 // pred_region
      %s16 = ssub.s32 256, 256
      %17 = vsyncadd [#allocation3], %s16
      %s18 = sshll.u32 [#allocation2], 4
      %s19 = int_to_ptr.vmem [resolvable:$true] %s18
      %24 = dma.hbm_to_vmem [thread:$0]  %s0, 256, %s19, [#allocation3], 128, 128, 8
    $region5: #{tpu_custom_call.1} parent=1 // pred_fallthru
      _
    // Predicated region
    $region6: #{tpu_custom_call.1} parent=1 // pred_check
      _
    $region7: #{tpu_custom_call.1} parent=1 // pred_check_branch
      %26 = sbr.rel (0) target = $region9
    $region8: #{tpu_custom_call.1} parent=1 // pred_region
      %s28 = ssub.s32 4096, 4096
      %29 = vsyncadd [#allocation6], %s28
      %s30 = sshll.u32 [#allocation5], 4
      %s31 = int_to_ptr.vmem [resolvable:$true] %s30
      %36 = dma.hbm_to_vmem [thread:$0]  %s1, 4096, %s31, [#allocation6], 128, 128, 8
    $region9: #{tpu_custom_call.1} parent=1 // pred_fallthru
      _
    // Predicated region
    $region10: #{tpu_custom_call.1} parent=1 // pred_check
      _
    $region11: #{tpu_custom_call.1} parent=1 // pred_check_branch
      %38 = sbr.rel (0) target = $region13
    $region12: #{tpu_custom_call.1} parent=1 // pred_region
      _
    $region13: #{tpu_custom_call.1} parent=1 // pred_fallthru
      _
    // Predicated region
    $region14: #{tpu_custom_call.1} parent=1 // pred_check
      _
    $region15: #{tpu_custom_call.1} parent=1 // pred_check_branch
      %40 = sbr.rel (0) target = $region17
    $region16: #{tpu_custom_call.1} parent=1 // pred_region
      %s42 = ssub.s32 4096, 4096
      %43 = vsyncadd [#allocation6], %s42
      %s44 = sshll.u32 [#allocation7], 4
      %s45 = int_to_ptr.vmem [resolvable:$true] %s44
      %50 = dma.hbm_to_vmem [thread:$0]  %s3, 4096, %s45, [#allocation6], 128, 128, 8
    $region17: #{tpu_custom_call.1} parent=1 // pred_fallthru
      _
    // Predicated region
    $region18: #{tpu_custom_call.1} parent=1 // pred_check
      _
    $region19: #{tpu_custom_call.1} parent=1 // pred_check_branch
      %52 = sbr.rel (0) target = $region21
    $region20: #{tpu_custom_call.1} parent=1 // pred_region
      _
    $region21: #{tpu_custom_call.1} parent=1 // pred_fallthru
      _
    // Predicated region
    $region22: #{tpu_custom_call.1} parent=1 // pred_check
      _
    $region23: #{tpu_custom_call.1} parent=1 // pred_check_branch
      %54 = sbr.rel (0) target = $region25
    $region24: #{tpu_custom_call.1} parent=1 // pred_region
      %55 = dma.done [#allocation3], 256
    $region25: #{tpu_custom_call.1} parent=1 // pred_fallthru
      _
    // Predicated region
    $region26: #{tpu_custom_call.1} parent=1 // pred_check
      _
    $region27: #{tpu_custom_call.1} parent=1 // pred_check_branch
      %57 = sbr.rel (0) target = $region29
    $region28: #{tpu_custom_call.1} parent=1 // pred_region
      %58 = dma.done [#allocation6], 4096
    $region29: #{tpu_custom_call.1} parent=1 // pred_fallthru
      _
    // Predicated region
    $region30: #{tpu_custom_call.1} parent=1 // pred_check
      _
    $region31: #{tpu_custom_call.1} parent=1 // pred_check_branch
      %60 = sbr.rel (0) target = $region33
    $region32: #{tpu_custom_call.1} parent=1 // pred_region
      %61 = dma.done [#allocation6], 4096
    $region33: #{tpu_custom_call.1} parent=1 // pred_fallthru
      _
    %v62 = vld [vmem:[#allocation2] sm:$0xff]
    %v63 = vld [vmem:[#allocation2 + $0x8] sm:$0xff]
    %v64 = vld [vmem:[#allocation5] sm:$0xff]
    %v65 = vld [vmem:[#allocation5 + $0x8] sm:$0xff]
    %v66 = vld [vmem:[#allocation5 + $0x10] sm:$0xff]
    %v67 = vld [vmem:[#allocation5 + $0x18] sm:$0xff]
    %v68 = vld [vmem:[#allocation5 + $0x20] sm:$0xff]
    %v69 = vld [vmem:[#allocation5 + $0x28] sm:$0xff]
    %v70 = vld [vmem:[#allocation5 + $0x30] sm:$0xff]
    %v71 = vld [vmem:[#allocation5 + $0x38] sm:$0xff]
    %v72 = vld [vmem:[#allocation5 + $0x40] sm:$0xff]
    %v73 = vld [vmem:[#allocation5 + $0x48] sm:$0xff]
    %v74 = vld [vmem:[#allocation5 + $0x50] sm:$0xff]
    %v75 = vld [vmem:[#allocation5 + $0x58] sm:$0xff]
    %v76 = vld [vmem:[#allocation5 + $0x60] sm:$0xff]
    %v77 = vld [vmem:[#allocation5 + $0x68] sm:$0xff]
    %v78 = vld [vmem:[#allocation5 + $0x70] sm:$0xff]
    %v79 = vld [vmem:[#allocation5 + $0x78] sm:$0xff]
    %v80 = vld [vmem:[#allocation5 + $0x80] sm:$0xff]
    %v81 = vld [vmem:[#allocation5 + $0x88] sm:$0xff]
    %v82 = vld [vmem:[#allocation5 + $0x90] sm:$0xff]
    %v83 = vld [vmem:[#allocation5 + $0x98] sm:$0xff]
    %v84 = vld [vmem:[#allocation5 + $0xa0] sm:$0xff]
    %v85 = vld [vmem:[#allocation5 + $0xa8] sm:$0xff]
    %v86 = vld [vmem:[#allocation5 + $0xb0] sm:$0xff]
    %v87 = vld [vmem:[#allocation5 + $0xb8] sm:$0xff]
    %v88 = vld [vmem:[#allocation5 + $0xc0] sm:$0xff]
    %v89 = vld [vmem:[#allocation5 + $0xc8] sm:$0xff]
    %v90 = vld [vmem:[#allocation5 + $0xd0] sm:$0xff]
    %v91 = vld [vmem:[#allocation5 + $0xd8] sm:$0xff]
    %v92 = vld [vmem:[#allocation5 + $0xe0] sm:$0xff]
    %v93 = vld [vmem:[#allocation5 + $0xe8] sm:$0xff]
    %v94 = vld [vmem:[#allocation5 + $0xf0] sm:$0xff]
    %v95 = vld [vmem:[#allocation5 + $0xf8] sm:$0xff]
    %v96 = vld [vmem:[%s2] sm:$0x3]
    %v98 = vlaneseq
    %v99 = vshrl.u32 %v98, 7
    %v100 = vsub.s32 0, %v99
    %v101 = vrot.slane %v96, %v100
    %v102 = vlaneseq
    %v103 = vshrl.u32 %v102, 7
    %v104 = vsub.s32 1, %v103
    %v105 = vrot.slane %v96, %v104
    %v110 = vunpack.c.l.b16 %v62
    %v111 = vunpack.c.h.b16 %v62
    %v112 = vunpack.c.l.b16 %v63
    %v113 = vunpack.c.h.b16 %v63
    %v114 = vpack.c.b16 %v112, %v110
    %v115 = vpack.c.b16 %v113, %v111
    %v150 = vunpack.c.l.b16 %v64
    %v151 = vunpack.c.h.b16 %v64
    %v152 = vunpack.c.l.b16 %v65
    %v153 = vunpack.c.h.b16 %v65
    %v154 = vunpack.c.l.b16 %v66
    %v155 = vunpack.c.h.b16 %v66
    %v156 = vunpack.c.l.b16 %v67
    %v157 = vunpack.c.h.b16 %v67
    %v158 = vunpack.c.l.b16 %v68
    %v159 = vunpack.c.h.b16 %v68
    %v160 = vunpack.c.l.b16 %v69
    %v161 = vunpack.c.h.b16 %v69
    %v162 = vunpack.c.l.b16 %v70
    %v163 = vunpack.c.h.b16 %v70
    %v164 = vunpack.c.l.b16 %v71
    %v165 = vunpack.c.h.b16 %v71
    %v166 = vunpack.c.l.b16 %v72
    %v167 = vunpack.c.h.b16 %v72
    %v168 = vunpack.c.l.b16 %v73
    %v169 = vunpack.c.h.b16 %v73
    %v170 = vunpack.c.l.b16 %v74
    %v171 = vunpack.c.h.b16 %v74
    %v172 = vunpack.c.l.b16 %v75
    %v173 = vunpack.c.h.b16 %v75
    %v174 = vunpack.c.l.b16 %v76
    %v175 = vunpack.c.h.b16 %v76
    %v176 = vunpack.c.l.b16 %v77
    %v177 = vunpack.c.h.b16 %v77
    %v178 = vunpack.c.l.b16 %v78
    %v179 = vunpack.c.h.b16 %v78
    %v180 = vunpack.c.l.b16 %v79
    %v181 = vunpack.c.h.b16 %v79
    %v182 = vunpack.c.l.b16 %v80
    %v183 = vunpack.c.h.b16 %v80
    %v184 = vunpack.c.l.b16 %v81
    %v185 = vunpack.c.h.b16 %v81
    %v186 = vunpack.c.l.b16 %v82
    %v187 = vunpack.c.h.b16 %v82
    %v188 = vunpack.c.l.b16 %v83
    %v189 = vunpack.c.h.b16 %v83
    %v190 = vunpack.c.l.b16 %v84
    %v191 = vunpack.c.h.b16 %v84
    %v192 = vunpack.c.l.b16 %v85
    %v193 = vunpack.c.h.b16 %v85
    %v194 = vunpack.c.l.b16 %v86
    %v195 = vunpack.c.h.b16 %v86
    %v196 = vunpack.c.l.b16 %v87
    %v197 = vunpack.c.h.b16 %v87
    %v198 = vunpack.c.l.b16 %v88
    %v199 = vunpack.c.h.b16 %v88
    %v200 = vunpack.c.l.b16 %v89
    %v201 = vunpack.c.h.b16 %v89
    %v202 = vunpack.c.l.b16 %v90
    %v203 = vunpack.c.h.b16 %v90
    %v204 = vunpack.c.l.b16 %v91
    %v205 = vunpack.c.h.b16 %v91
    %v206 = vunpack.c.l.b16 %v92
    %v207 = vunpack.c.h.b16 %v92
    %v208 = vunpack.c.l.b16 %v93
    %v209 = vunpack.c.h.b16 %v93
    %v210 = vunpack.c.l.b16 %v94
    %v211 = vunpack.c.h.b16 %v94
    %v212 = vunpack.c.l.b16 %v95
    %v213 = vunpack.c.h.b16 %v95
    %v214 = vpack.c.b16 %v152, %v150
    %v215 = vpack.c.b16 %v153, %v151
    %v216 = vpack.c.b16 %v156, %v154
    %v217 = vpack.c.b16 %v157, %v155
    %v218 = vpack.c.b16 %v160, %v158
    %v219 = vpack.c.b16 %v161, %v159
    %v220 = vpack.c.b16 %v164, %v162
    %v221 = vpack.c.b16 %v165, %v163
    %v222 = vpack.c.b16 %v168, %v166
    %v223 = vpack.c.b16 %v169, %v167
    %v224 = vpack.c.b16 %v172, %v170
    %v225 = vpack.c.b16 %v173, %v171
    %v226 = vpack.c.b16 %v176, %v174
    %v227 = vpack.c.b16 %v177, %v175
    %v228 = vpack.c.b16 %v180, %v178
    %v229 = vpack.c.b16 %v181, %v179
    %v230 = vpack.c.b16 %v184, %v182
    %v231 = vpack.c.b16 %v185, %v183
    %v232 = vpack.c.b16 %v188, %v186
    %v233 = vpack.c.b16 %v189, %v187
    %v234 = vpack.c.b16 %v192, %v190
    %v235 = vpack.c.b16 %v193, %v191
    %v236 = vpack.c.b16 %v196, %v194
    %v237 = vpack.c.b16 %v197, %v195
    %v238 = vpack.c.b16 %v200, %v198
    %v239 = vpack.c.b16 %v201, %v199
    %v240 = vpack.c.b16 %v204, %v202
    %v241 = vpack.c.b16 %v205, %v203
    %v242 = vpack.c.b16 %v208, %v206
    %v243 = vpack.c.b16 %v209, %v207
    %v244 = vpack.c.b16 %v212, %v210
    %v245 = vpack.c.b16 %v213, %v211
    %278 = vmatprep.subr.bf16.mxu0 %v215
    %279 = vmatpush1.bf16.msra.mxu0 %v214
    %280 = vmatprep.subr.bf16.mxu0 %v217
    %281 = vmatpush1.bf16.msra.mxu0 %v216
    %282 = vmatprep.subr.bf16.mxu0 %v219
    %283 = vmatpush1.bf16.msra.mxu0 %v218
    %284 = vmatprep.subr.bf16.mxu0 %v221
    %285 = vmatpush1.bf16.msra.mxu0 %v220
    %286 = vmatprep.subr.bf16.mxu0 %v223
    %287 = vmatpush1.bf16.msra.mxu0 %v222
    %288 = vmatprep.subr.bf16.mxu0 %v225
    %289 = vmatpush1.bf16.msra.mxu0 %v224
    %290 = vmatprep.subr.bf16.mxu0 %v227
    %291 = vmatpush1.bf16.msra.mxu0 %v226
    %292 = vmatprep.subr.bf16.mxu0 %v229
    %293 = vmatpush1.bf16.msra.mxu0 %v228
    %294 = vmatprep.subr.bf16.mxu0 %v231
    %295 = vmatpush1.bf16.msra.mxu0 %v230
    %296 = vmatprep.subr.bf16.mxu0 %v233
    %297 = vmatpush1.bf16.msra.mxu0 %v232
    %298 = vmatprep.subr.bf16.mxu0 %v235
    %299 = vmatpush1.bf16.msra.mxu0 %v234
    %300 = vmatprep.subr.bf16.mxu0 %v237
    %301 = vmatpush1.bf16.msra.mxu0 %v236
    %302 = vmatprep.subr.bf16.mxu0 %v239
    %303 = vmatpush1.bf16.msra.mxu0 %v238
    %304 = vmatprep.subr.bf16.mxu0 %v241
    %305 = vmatpush1.bf16.msra.mxu0 %v240
    %306 = vmatprep.subr.bf16.mxu0 %v243
    %307 = vmatpush1.bf16.msra.mxu0 %v242
    %308 = vmatprep.subr.bf16.mxu0 %v245
    %309 = vmatpush1.bf16.msra.mxu0 %v244
    %310 = vmatprep.mubr.bf16.mxu0 %v115
    %311 = vmatmul.mubr.bf16.gmra.mrb[0].mxu0 %v114
    %v312 = vpop.f32.mrb[0].mxu0
    %v313 = vadd.f32 %v101, %v312
    %v314 = vpop.f32.mrb[0].mxu0
    %v315 = vadd.f32 %v105, %v314
    %v316 = vpop.f32.mrb[0].mxu0
    %v317 = vadd.f32 %v101, %v316
    %v318 = vpop.f32.mrb[0].mxu0
    %v319 = vadd.f32 %v105, %v318
    %320 = vdwg.mxu0
    %v321 = vmul.f32 %v313, 0.5
    %v322 = vmul.f32 %v315, 0.5
    %v323 = vmul.f32 %v317, 0.5
    %v324 = vmul.f32 %v319, 0.5
    %v325 = vmul.f32 %v313, 0.70710677
    %v326 = vmul.f32 %v315, 0.70710677
    %v327 = vmul.f32 %v317, 0.70710677
    %v328 = vmul.f32 %v319, 0.70710677
    %v329 = verf.f32.pop %v325
    %v330 = verf.f32.pop %v326
    %v331 = verf.f32.pop %v327
    %v332 = verf.f32.pop %v328
    %v333 = vadd.f32 %v329, 1.0
    %v334 = vadd.f32 %v330, 1.0
    %v335 = vadd.f32 %v331, 1.0
    %v336 = vadd.f32 %v332, 1.0
    %v337 = vmul.f32 %v321, %v333
    %v338 = vmul.f32 %v322, %v334
    %v339 = vmul.f32 %v323, %v335
    %v340 = vmul.f32 %v324, %v336
    %v341 = vpack.c.bf16 %v339, %v337
    %v342 = vpack.c.bf16 %v340, %v338
    %v343 = vld [vmem:[#allocation7] sm:$0xff]
    %v344 = vld [vmem:[#allocation7 + $0x8] sm:$0xff]
    %v345 = vld [vmem:[#allocation7 + $0x10] sm:$0xff]
    %v346 = vld [vmem:[#allocation7 + $0x18] sm:$0xff]
    %v347 = vld [vmem:[#allocation7 + $0x20] sm:$0xff]
    %v348 = vld [vmem:[#allocation7 + $0x28] sm:$0xff]
    %v349 = vld [vmem:[#allocation7 + $0x30] sm:$0xff]
    %v350 = vld [vmem:[#allocation7 + $0x38] sm:$0xff]
    %v351 = vld [vmem:[#allocation7 + $0x40] sm:$0xff]
    %v352 = vld [vmem:[#allocation7 + $0x48] sm:$0xff]
    %v353 = vld [vmem:[#allocation7 + $0x50] sm:$0xff]
    %v354 = vld [vmem:[#allocation7 + $0x58] sm:$0xff]
    %v355 = vld [vmem:[#allocation7 + $0x60] sm:$0xff]
    %v356 = vld [vmem:[#allocation7 + $0x68] sm:$0xff]
    %v357 = vld [vmem:[#allocation7 + $0x70] sm:$0xff]
    %v358 = vld [vmem:[#allocation7 + $0x78] sm:$0xff]
    %v359 = vld [vmem:[#allocation7 + $0x80] sm:$0xff]
    %v360 = vld [vmem:[#allocation7 + $0x88] sm:$0xff]
    %v361 = vld [vmem:[#allocation7 + $0x90] sm:$0xff]
    %v362 = vld [vmem:[#allocation7 + $0x98] sm:$0xff]
    %v363 = vld [vmem:[#allocation7 + $0xa0] sm:$0xff]
    %v364 = vld [vmem:[#allocation7 + $0xa8] sm:$0xff]
    %v365 = vld [vmem:[#allocation7 + $0xb0] sm:$0xff]
    %v366 = vld [vmem:[#allocation7 + $0xb8] sm:$0xff]
    %v367 = vld [vmem:[#allocation7 + $0xc0] sm:$0xff]
    %v368 = vld [vmem:[#allocation7 + $0xc8] sm:$0xff]
    %v369 = vld [vmem:[#allocation7 + $0xd0] sm:$0xff]
    %v370 = vld [vmem:[#allocation7 + $0xd8] sm:$0xff]
    %v371 = vld [vmem:[#allocation7 + $0xe0] sm:$0xff]
    %v372 = vld [vmem:[#allocation7 + $0xe8] sm:$0xff]
    %v373 = vld [vmem:[#allocation7 + $0xf0] sm:$0xff]
    %v374 = vld [vmem:[#allocation7 + $0xf8] sm:$0xff]
    %v375 = vld [vmem:[%s4] sm:$0x3]
    %v377 = vlaneseq
    %v378 = vshrl.u32 %v377, 7
    %v379 = vsub.s32 0, %v378
    %v380 = vrot.slane %v375, %v379
    %v381 = vlaneseq
    %v382 = vshrl.u32 %v381, 7
    %v383 = vsub.s32 1, %v382
    %v384 = vrot.slane %v375, %v383
    %v419 = vunpack.c.l.b16 %v343
    %v420 = vunpack.c.h.b16 %v343
    %v421 = vunpack.c.l.b16 %v344
    %v422 = vunpack.c.h.b16 %v344
    %v423 = vunpack.c.l.b16 %v345
    %v424 = vunpack.c.h.b16 %v345
    %v425 = vunpack.c.l.b16 %v346
    %v426 = vunpack.c.h.b16 %v346
    %v427 = vunpack.c.l.b16 %v347
    %v428 = vunpack.c.h.b16 %v347
    %v429 = vunpack.c.l.b16 %v348
    %v430 = vunpack.c.h.b16 %v348
    %v431 = vunpack.c.l.b16 %v349
    %v432 = vunpack.c.h.b16 %v349
    %v433 = vunpack.c.l.b16 %v350
    %v434 = vunpack.c.h.b16 %v350
    %v435 = vunpack.c.l.b16 %v351
    %v436 = vunpack.c.h.b16 %v351
    %v437 = vunpack.c.l.b16 %v352
    %v438 = vunpack.c.h.b16 %v352
    %v439 = vunpack.c.l.b16 %v353
    %v440 = vunpack.c.h.b16 %v353
    %v441 = vunpack.c.l.b16 %v354
    %v442 = vunpack.c.h.b16 %v354
    %v443 = vunpack.c.l.b16 %v355
    %v444 = vunpack.c.h.b16 %v355
    %v445 = vunpack.c.l.b16 %v356
    %v446 = vunpack.c.h.b16 %v356
    %v447 = vunpack.c.l.b16 %v357
    %v448 = vunpack.c.h.b16 %v357
    %v449 = vunpack.c.l.b16 %v358
    %v450 = vunpack.c.h.b16 %v358
    %v451 = vunpack.c.l.b16 %v359
    %v452 = vunpack.c.h.b16 %v359
    %v453 = vunpack.c.l.b16 %v360
    %v454 = vunpack.c.h.b16 %v360
    %v455 = vunpack.c.l.b16 %v361
    %v456 = vunpack.c.h.b16 %v361
    %v457 = vunpack.c.l.b16 %v362
    %v458 = vunpack.c.h.b16 %v362
    %v459 = vunpack.c.l.b16 %v363
    %v460 = vunpack.c.h.b16 %v363
    %v461 = vunpack.c.l.b16 %v364
    %v462 = vunpack.c.h.b16 %v364
    %v463 = vunpack.c.l.b16 %v365
    %v464 = vunpack.c.h.b16 %v365
    %v465 = vunpack.c.l.b16 %v366
    %v466 = vunpack.c.h.b16 %v366
    %v467 = vunpack.c.l.b16 %v367
    %v468 = vunpack.c.h.b16 %v367
    %v469 = vunpack.c.l.b16 %v368
    %v470 = vunpack.c.h.b16 %v368
    %v471 = vunpack.c.l.b16 %v369
    %v472 = vunpack.c.h.b16 %v369
    %v473 = vunpack.c.l.b16 %v370
    %v474 = vunpack.c.h.b16 %v370
    %v475 = vunpack.c.l.b16 %v371
    %v476 = vunpack.c.h.b16 %v371
    %v477 = vunpack.c.l.b16 %v372
    %v478 = vunpack.c.h.b16 %v372
    %v479 = vunpack.c.l.b16 %v373
    %v480 = vunpack.c.h.b16 %v373
    %v481 = vunpack.c.l.b16 %v374
    %v482 = vunpack.c.h.b16 %v374
    %v483 = vpack.c.b16 %v421, %v419
    %v484 = vpack.c.b16 %v422, %v420
    %v485 = vpack.c.b16 %v425, %v423
    %v486 = vpack.c.b16 %v426, %v424
    %v487 = vpack.c.b16 %v429, %v427
    %v488 = vpack.c.b16 %v430, %v428
    %v489 = vpack.c.b16 %v433, %v431
    %v490 = vpack.c.b16 %v434, %v432
    %v491 = vpack.c.b16 %v437, %v435
    %v492 = vpack.c.b16 %v438, %v436
    %v493 = vpack.c.b16 %v441, %v439
    %v494 = vpack.c.b16 %v442, %v440
    %v495 = vpack.c.b16 %v445, %v443
    %v496 = vpack.c.b16 %v446, %v444
    %v497 = vpack.c.b16 %v449, %v447
    %v498 = vpack.c.b16 %v450, %v448
    %v499 = vpack.c.b16 %v453, %v451
    %v500 = vpack.c.b16 %v454, %v452
    %v501 = vpack.c.b16 %v457, %v455
    %v502 = vpack.c.b16 %v458, %v456
    %v503 = vpack.c.b16 %v461, %v459
    %v504 = vpack.c.b16 %v462, %v460
    %v505 = vpack.c.b16 %v465, %v463
    %v506 = vpack.c.b16 %v466, %v464
    %v507 = vpack.c.b16 %v469, %v467
    %v508 = vpack.c.b16 %v470, %v468
    %v509 = vpack.c.b16 %v473, %v471
    %v510 = vpack.c.b16 %v474, %v472
    %v511 = vpack.c.b16 %v477, %v475
    %v512 = vpack.c.b16 %v478, %v476
    %v513 = vpack.c.b16 %v481, %v479
    %v514 = vpack.c.b16 %v482, %v480
    %547 = vmatprep.subr.bf16.mxu0 %v484
    %548 = vmatpush1.bf16.msra.mxu0 %v483
    %549 = vmatprep.subr.bf16.mxu0 %v486
    %550 = vmatpush1.bf16.msra.mxu0 %v485
    %551 = vmatprep.subr.bf16.mxu0 %v488
    %552 = vmatpush1.bf16.msra.mxu0 %v487
    %553 = vmatprep.subr.bf16.mxu0 %v490
    %554 = vmatpush1.bf16.msra.mxu0 %v489
    %555 = vmatprep.subr.bf16.mxu0 %v492
    %556 = vmatpush1.bf16.msra.mxu0 %v491
    %557 = vmatprep.subr.bf16.mxu0 %v494
    %558 = vmatpush1.bf16.msra.mxu0 %v493
    %559 = vmatprep.subr.bf16.mxu0 %v496
    %560 = vmatpush1.bf16.msra.mxu0 %v495
    %561 = vmatprep.subr.bf16.mxu0 %v498
    %562 = vmatpush1.bf16.msra.mxu0 %v497
    %563 = vmatprep.subr.bf16.mxu0 %v500
    %564 = vmatpush1.bf16.msra.mxu0 %v499
    %565 = vmatprep.subr.bf16.mxu0 %v502
    %566 = vmatpush1.bf16.msra.mxu0 %v501
    %567 = vmatprep.subr.bf16.mxu0 %v504
    %568 = vmatpush1.bf16.msra.mxu0 %v503
    %569 = vmatprep.subr.bf16.mxu0 %v506
    %570 = vmatpush1.bf16.msra.mxu0 %v505
    %571 = vmatprep.subr.bf16.mxu0 %v508
    %572 = vmatpush1.bf16.msra.mxu0 %v507
    %573 = vmatprep.subr.bf16.mxu0 %v510
    %574 = vmatpush1.bf16.msra.mxu0 %v509
    %575 = vmatprep.subr.bf16.mxu0 %v512
    %576 = vmatpush1.bf16.msra.mxu0 %v511
    %577 = vmatprep.subr.bf16.mxu0 %v514
    %578 = vmatpush1.bf16.msra.mxu0 %v513
    %579 = vmatprep.mubr.bf16.mxu0 %v342
    %580 = vmatmul.mubr.bf16.gmra.mrb[0].mxu0 %v341
    %v581 = vpop.f32.mrb[0].mxu0
    %v582 = vadd.f32 %v380, %v581
    %v583 = vpop.f32.mrb[0].mxu0
    %v584 = vadd.f32 %v384, %v583
    %v585 = vpop.f32.mrb[0].mxu0
    %v586 = vadd.f32 %v380, %v585
    %v587 = vpop.f32.mrb[0].mxu0
    %v588 = vadd.f32 %v384, %v587
    %589 = vdwg.mxu0
    %590 = vst [vmem:[#allocation8] sm:$0xff] %v582
    %591 = vst [vmem:[#allocation8 + $0x8] sm:$0xff] %v584
    %592 = vst [vmem:[#allocation8 + $0x10] sm:$0xff] %v586
    %593 = vst [vmem:[#allocation8 + $0x18] sm:$0xff] %v588
    // Predicated region
    $region34: #{tpu_custom_call.1} parent=1 // pred_check
      _
    $region35: #{tpu_custom_call.1} parent=1 // pred_check_branch
      %595 = sbr.rel (0) target = $region37
    $region36: #{tpu_custom_call.1} parent=1 // pred_region
      %s597 = ssub.s32 512, 512
      %598 = vsyncadd [#allocation4], %s597
      %s599 = sshll.u32 [#allocation8], 4
      %s600 = int_to_ptr.vmem [resolvable:$true] %s599
      %605 = dma.vmem_to_hbm [thread:$0]  %s600, 512, %s5, [#allocation4], 256, 256, 16
    $region37: #{tpu_custom_call.1} parent=1 // pred_fallthru
      _
    // Predicated region
    $region38: #{tpu_custom_call.1} parent=1 // pred_check
      _
    $region39: #{tpu_custom_call.1} parent=1 // pred_check_branch
      %607 = sbr.rel (0) target = $region41
    $region40: #{tpu_custom_call.1} parent=1 // pred_region
      %608 = dma.done [#allocation4], 512
    $region41: #{tpu_custom_call.1} parent=1 // pred_fallthru
      _
    %609 = vsyncpa [#allocation3], 1
    %610 = vsyncpa [#allocation6], 1
    %611 = vsyncpa [#allocation4], 1

</llo_original>
